<compile_context>
chip_gen: v7x
topology: tpu7x:2x2x1
jax: 0.10.0
libtpu: 0.0.40
codegen_flags: <defaults>
</compile_context>

<pallas_src>
import jax
import jax.numpy as jnp
from jax.experimental import pallas as pl
from jax.experimental.pallas import tpu as pltpu


def _linear_kernel(x_ref, w_ref, b_ref, o_ref):
    # x_ref: (TB, F), w_ref: (F, C), b_ref: (1, C), o_ref: (TB, C)
    acc = jnp.dot(x_ref[...], w_ref[...], preferred_element_type=jnp.float32)
    o_ref[...] = (acc + b_ref[...]).astype(o_ref.dtype)


def _round_up(n, m):
    return ((n + m - 1) // m) * m


def _round_down_8(n):
    return max(8, (n // 8) * 8)


def logistic_regression_forward(x, weight, bias, *, vmem_budget_bytes=32 * 1024 * 1024):
    """Forward pass of nn.Linear(num_features, num_classes).

    x:      (B, F) float32
    weight: (C, F) float32  -- PyTorch convention (out_features, in_features)
    bias:   (C,)   float32
    returns (B, C) float32
    """
    B, F = x.shape
    C, Fw = weight.shape
    assert Fw == F and bias.shape == (C,)

    # MXU-canonical weight layout (F, C).  One-time parameter-layout change
    # (amortized at init time in a real model); avoids per-tile relayout of the
    # weight block inside the kernel.
    w_fc = weight.T
    b2d = bias.reshape(1, C)

    itemsize = jnp.dtype(x.dtype).itemsize  # 4 for f32

    # ---- VMEM-budget-driven batch tile (layout-padded accounting) -----------
    F_lane = _round_up(F, 128)   # VMEM lane (last-dim) padding
    C_lane = _round_up(C, 128)

    # Resident parameters: constant index_map => extra pipeline buffers are pure
    # VMEM waste.  Single-buffer them once they are big enough to matter; keep the
    # default (double-buffered) path for tiny weights, where the savings are noise.
    param_vmem_per_buf = (_round_up(F, 8) * C_lane + 8 * C_lane) * itemsize
    single_buffer_params = param_vmem_per_buf >= (2 << 20)
    param_buf = 1 if single_buffer_params else 2
    param_vmem = param_buf * param_vmem_per_buf

    # x and out tiles are double-buffered by the pipeline.
    row_vmem = 2 * itemsize * (F_lane + C_lane)
    rows_budget = max((vmem_budget_bytes - param_vmem) // row_vmem, 8)
    rows_budget = min(rows_budget, 8192)          # diminishing returns past this

    if B <= rows_budget:
        if B >= 1024:
            # Keep >= 2 grid steps so the "parallel" batch axis can be split
            # across v7x's two TensorCores (no effect on single-TC v5e/v6e).
            TB = _round_down_8(pl.cdiv(B, 2))
        else:
            TB = B                                # full-dim block; grid == 1
    else:
        TB = _round_down_8(rows_budget)

    grid = (pl.cdiv(B, TB),)   # ragged last block is write-masked by Pallas

    param_spec_kwargs = (
        {"pipeline_mode": pl.Buffered(1)} if single_buffer_params else {}
    )

    footprint = 2 * _round_up(TB, 8) * (F_lane + C_lane) * itemsize + param_vmem
    vmem_limit = int(min(max(footprint + (8 << 20), 16 << 20), 56 << 20))

    out = pl.pallas_call(
        _linear_kernel,
        out_shape=jax.ShapeDtypeStruct((B, C), x.dtype),
        grid=grid,
        in_specs=[
            pl.BlockSpec((TB, F), lambda i: (i, 0)),                      # x: batch-tiled
            pl.BlockSpec((F, C), lambda i: (0, 0), **param_spec_kwargs),  # weight: resident
            pl.BlockSpec((1, C), lambda i: (0, 0), **param_spec_kwargs),  # bias: resident
        ],
        out_specs=pl.BlockSpec((TB, C), lambda i: (i, 0)),                # last dim == full C
        compiler_params=pltpu.CompilerParams(
            dimension_semantics=("parallel",),
            vmem_limit_bytes=vmem_limit,
        ),
    )(x, w_fc, b2d)

    return out


if __name__ == "__main__":
    # Small shapes implied by the module: num_features=32, num_classes=4, batch=8.
    batch, num_features, num_classes = 8, 32, 4

    key = jax.random.PRNGKey(0)
    kx, kw, kb = jax.random.split(key, 3)

    x = jax.random.normal(kx, (batch, num_features), dtype=jnp.float32)
    # Deterministic parameter init (mimics nn.Linear's uniform(-1/sqrt(F), 1/sqrt(F)))
    bound = 1.0 / (num_features ** 0.5)
    weight = jax.random.uniform(
        kw, (num_classes, num_features), minval=-bound, maxval=bound, dtype=jnp.float32
    )
    bias = jax.random.uniform(
        kb, (num_classes,), minval=-bound, maxval=bound, dtype=jnp.float32
    )

    out = logistic_regression_forward(x, weight, bias)
    out = jax.block_until_ready(out)

    # Reference check against plain JAX
    ref = x @ weight.T + bias
    assert out.shape == (batch, num_classes)
    assert jnp.allclose(out, ref, atol=1e-5, rtol=1e-5)

    print("KERNEL_OK")
</pallas_src>

<mosaic_0001>
module attributes {stable_mosaic.version = 11 : i64} {
  func.func @_linear_kernel(%arg0: i32, %arg1: memref<8x32xf32, #tpu.memory_space<vmem>>, %arg2: memref<32x4xf32, #tpu.memory_space<vmem>>, %arg3: memref<1x4xf32, #tpu.memory_space<vmem>>, %arg4: memref<8x4xf32, #tpu.memory_space<vmem>>) attributes {dimension_semantics = [#tpu.dimension_semantics<parallel>], iteration_bounds = array<i64: 1>, scalar_prefetch = 0 : i64, scratch_operands = 0 : i64, tpu.core_type = #tpu.core_type<tc>, window_params = [{transform_indices = @transform_0, window_bounds = array<i64: 8, 32>}, {pipeline_mode = #tpu.pipeline_mode<synchronous>, transform_indices = @transform_1, window_bounds = array<i64: 32, 4>}, {pipeline_mode = #tpu.pipeline_mode<synchronous>, transform_indices = @transform_2, window_bounds = array<i64: 1, 4>}, {transform_indices = @transform_3, window_bounds = array<i64: 8, 4>}]} {
    %c0 = arith.constant 0 : index
    %c0_0 = arith.constant 0 : index
    %0 = vector.load %arg1[%c0, %c0_0] : memref<8x32xf32, #tpu.memory_space<vmem>>, vector<8x32xf32>
    %c0_1 = arith.constant 0 : index
    %c0_2 = arith.constant 0 : index
    %1 = vector.load %arg2[%c0_1, %c0_2] : memref<32x4xf32, #tpu.memory_space<vmem>>, vector<32x4xf32>
    %cst = arith.constant dense<0.000000e+00> : vector<8x4xf32>
    %2 = tpu.matmul %0, %1, %cst {dimension_numbers = #tpu.dot_dimension_numbers<[1], [0], [0], [1], [0, 0, 1, 1], [], []>} : vector<8x32xf32>, vector<32x4xf32>, vector<8x4xf32> -> vector<8x4xf32>
    %c0_3 = arith.constant 0 : index
    %c0_4 = arith.constant 0 : index
    %3 = vector.load %arg3[%c0_3, %c0_4] : memref<1x4xf32, #tpu.memory_space<vmem>>, vector<1x4xf32>
    %4 = vector.broadcast %3 : vector<1x4xf32> to vector<8x4xf32>
    %5 = arith.addf %2, %4 : vector<8x4xf32>
    %c0_5 = arith.constant 0 : index
    %c0_6 = arith.constant 0 : index
    %6 = vector.load %arg4[%c0_5, %c0_6] : memref<8x4xf32, #tpu.memory_space<vmem>>, vector<8x4xf32>
    tpu.vector_store %arg4[%c0_5, %c0_6], %5 {strides = array<i32>} : memref<8x4xf32, #tpu.memory_space<vmem>>, vector<8x4xf32>,
    return
  }
  func.func @transform_0(%arg0: i32) -> (i32, i32) {
    %c0_i32 = arith.constant 0 : i32
    %c0_i32_0 = arith.constant 0 : i32
    return %arg0, %c0_i32 : i32, i32
  }
  func.func @transform_1(%arg0: i32) -> (i32, i32) {
    %c0_i32 = arith.constant 0 : i32
    %c0_i32_0 = arith.constant 0 : i32
    %c0_i32_1 = arith.constant 0 : i32
    return %c0_i32, %c0_i32_0 : i32, i32
  }
  func.func @transform_2(%arg0: i32) -> (i32, i32) {
    %c0_i32 = arith.constant 0 : i32
    %c0_i32_0 = arith.constant 0 : i32
    %c0_i32_1 = arith.constant 0 : i32
    return %c0_i32, %c0_i32_0 : i32, i32
  }
  func.func @transform_3(%arg0: i32) -> (i32, i32) {
    %c0_i32 = arith.constant 0 : i32
    %c0_i32_0 = arith.constant 0 : i32
    return %arg0, %c0_i32 : i32, i32
  }
}

</mosaic_0001>

<llo_original>
// kernel: tpu_custom_call.1
$region0: #{tpu_custom_call.1}
  #allocation0 [shape = 'u32[]', space=smem, size = 0x4, offset = 0x4, fixed_abs, tag = 'smem constant byte address 0x4 - core index']
  #allocation1 [shape = 'u32[144,128]{1,0:T(1,128)}', space=vmem, size = 0x12000, scoped, tag = 'internal scratch']
  %s0 = inlined_call_operand.vmem [shape: f32[8,32], index: 0, kind: input, shape index: {}]
  %s1 = inlined_call_operand.vmem [shape: f32[32,4], index: 1, kind: input, shape index: {}]
  %s2 = inlined_call_operand.vmem [shape: f32[1,4], index: 2, kind: input, shape index: {}]
  %s3 = inlined_call_operand.vmem [shape: f32[8,4], index: 3, kind: output, shape index: {}]
  %s4 = sld [smem:[#allocation0]]
  $region22: #{tpu_custom_call.1} parent=0
    _
  %s6 = ssub.s32 1, %s4
  %s7 = scalar_select 0, %s6, %s4
  // Predicated region
  $region2: #{tpu_custom_call.1} parent=0 // pred_check
    _
  $region3: #{tpu_custom_call.1} parent=0 // pred_check_branch
    %9 = sbr.rel (0) target = $region5
  $region4: #{tpu_custom_call.1} parent=0 // pred_region
    _
  $region5: #{tpu_custom_call.1} parent=0 // pred_fallthru
    _
  // Predicated region
  $region6: #{tpu_custom_call.1} parent=0 // pred_check
    _
  $region7: #{tpu_custom_call.1} parent=0 // pred_check_branch
    %11 = sbr.rel (0) target = $region9
  $region8: #{tpu_custom_call.1} parent=0 // pred_region
    _
  $region9: #{tpu_custom_call.1} parent=0 // pred_fallthru
    _
  // Predicated region
  $region10: #{tpu_custom_call.1} parent=0 // pred_check
    _
  $region11: #{tpu_custom_call.1} parent=0 // pred_check_branch
    %13 = sbr.rel (0) target = $region13
  $region12: #{tpu_custom_call.1} parent=0 // pred_region
    _
  $region13: #{tpu_custom_call.1} parent=0 // pred_fallthru
    _
  %v14 = vld [vmem:[%s0] sm:$0xff]
  %v15 = vld [vmem:[%s1] sm:$0xff]
  %v16 = vld [vmem:[%s1 + $0x8] sm:$0xff]
  %v17 = vld [vmem:[%s1 + $0x10] sm:$0xff]
  %v18 = vld [vmem:[%s1 + $0x18] sm:$0xff]
  %v19 = vld [vmem:[%s2] sm:$0x1]
  %v21 = vlaneseq
  %v22 = vshrl.u32 %v21, 7
  %v23 = vsub.s32 0, %v22
  %v24 = vrot.slane %v19, %v23
  %vm26 = vcmask 261120
  %v28 = vsel %vm26, %v14, 0
  %30 = vmatprep.subr.mxu0 0.0
  %31 = vmatpush1.msra.mxu0 %v15
  %32 = vmatprep.subr.mxu0 0.0
  %33 = vmatpush1.msra.mxu0 %v16
  %34 = vmatprep.subr.mxu0 0.0
  %35 = vmatpush1.msra.mxu0 %v17
  %36 = vmatprep.subr.mxu0 0.0
  %37 = vmatpush1.msra.mxu0 %v18
  %38 = vmatprep.subr.mxu0 0.0
  %39 = vmatpush1.msra.mxu0 0.0
  %40 = vmatprep.subr.mxu0 0.0
  %41 = vmatpush1.msra.mxu0 0.0
  %42 = vmatprep.subr.mxu0 0.0
  %43 = vmatpush1.msra.mxu0 0.0
  %44 = vmatprep.subr.mxu0 0.0
  %45 = vmatpush1.msra.mxu0 0.0
  %46 = vmatprep.subr.mxu0 0.0
  %47 = vmatpush1.msra.mxu0 0.0
  %48 = vmatprep.subr.mxu0 0.0
  %49 = vmatpush1.msra.mxu0 0.0
  %50 = vmatprep.subr.mxu0 0.0
  %51 = vmatpush1.msra.mxu0 0.0
  %52 = vmatprep.subr.mxu0 0.0
  %53 = vmatpush1.msra.mxu0 0.0
  %54 = vmatprep.subr.mxu0 0.0
  %55 = vmatpush1.msra.mxu0 0.0
  %56 = vmatprep.subr.mxu0 0.0
  %57 = vmatpush1.msra.mxu0 0.0
  %58 = vmatprep.subr.mxu0 0.0
  %59 = vmatpush1.msra.mxu0 0.0
  %60 = vmatprep.subr.mxu0 0.0
  %61 = vmatpush1.msra.mxu0 0.0
  %62 = vmatprep.subr.mxu0 0.0
  %63 = vmatpush1.msra.mxu0 0.0
  %64 = vmatprep.subr.mxu0 0.0
  %65 = vmatpush1.msra.mxu0 0.0
  %66 = vmatprep.subr.mxu0 0.0
  %67 = vmatpush1.msra.mxu0 0.0
  %68 = vmatprep.subr.mxu0 0.0
  %69 = vmatpush1.msra.mxu0 0.0
  %70 = vmatprep.subr.mxu0 0.0
  %71 = vmatpush1.msra.mxu0 0.0
  %72 = vmatprep.subr.mxu0 0.0
  %73 = vmatpush1.msra.mxu0 0.0
  %74 = vmatprep.subr.mxu0 0.0
  %75 = vmatpush1.msra.mxu0 0.0
  %76 = vmatprep.subr.mxu0 0.0
  %77 = vmatpush1.msra.mxu0 0.0
  %78 = vmatprep.subr.mxu0 0.0
  %79 = vmatpush1.msra.mxu0 0.0
  %80 = vmatprep.subr.mxu0 0.0
  %81 = vmatpush1.msra.mxu0 0.0
  %82 = vmatprep.subr.mxu0 0.0
  %83 = vmatpush1.msra.mxu0 0.0
  %84 = vmatprep.subr.mxu0 0.0
  %85 = vmatpush1.msra.mxu0 0.0
  %86 = vmatprep.subr.mxu0 0.0
  %87 = vmatpush1.msra.mxu0 0.0
  %88 = vmatprep.subr.mxu0 0.0
  %89 = vmatpush1.msra.mxu0 0.0
  %90 = vmatprep.subr.mxu0 0.0
  %91 = vmatpush1.msra.mxu0 0.0
  %92 = vmatprep.subr.mxu0 0.0
  %93 = vmatpush1.msra.mxu0 0.0
  %94 = vmatprep.mubr.f32.mxu0 0.0
  %95 = vmatmul.mubr.f32.gmra.mrb[0].mxu0 %v28
  %v96 = vpop.f32.mrb[0].mxu0
  %v97 = vadd.f32 %v24, %v96
  %v98 = vpop.f32.mrb[0].mxu0
  %99 = vdwg.mxu0
  %vm100 = vcmask 31744
  %101 = vst.msk [vmem:[%s3] sm:$0xff] %vm100, %v97
  // Predicated region
  $region14: #{tpu_custom_call.1} parent=0 // pred_check
    _
  $region15: #{tpu_custom_call.1} parent=0 // pred_check_branch
    %103 = sbr.rel (0) target = $region17
  $region16: #{tpu_custom_call.1} parent=0 // pred_region
    _
  $region17: #{tpu_custom_call.1} parent=0 // pred_fallthru
    _
  // Predicated region
  $region18: #{tpu_custom_call.1} parent=0 // pred_check
    _
  $region19: #{tpu_custom_call.1} parent=0 // pred_check_branch
    %105 = sbr.rel (0) target = $region21
  $region20: #{tpu_custom_call.1} parent=0 // pred_region
    _
  $region21: #{tpu_custom_call.1} parent=0 // pred_fallthru
    _

</llo_original>
